<compile_context>
chip_gen: v6e
topology: v6e:2x2x1
jax: 0.10.0
libtpu: 0.0.40
codegen_flags: <defaults>
</compile_context>

<pallas_src>
import math
import functools

import jax
import jax.numpy as jnp
from jax.experimental import pallas as pl
from jax.experimental.pallas import tpu as pltpu


def _round_up(x, m):
    return ((x + m - 1) // m) * m


def _round_down(x, m):
    return (x // m) * m


# ---------------------------------------------------------------------------
# Kernels
# ---------------------------------------------------------------------------

def _lora_kernel_full(x_ref, a_ref, b_ref, o_ref, *, scaling):
    # Full-width-output path: grid = (M/tm,).
    # x_ref: (tm, in_dim), a_ref: (in_dim, r), b_ref: (r, out_dim),
    # o_ref: (tm, out_dim).
    xa = jnp.dot(x_ref[...], a_ref[...], preferred_element_type=jnp.float32)
    xa = (scaling * xa).astype(b_ref.dtype)   # scale the tiny (tm, r) tensor
    o_ref[...] = jnp.dot(
        xa, b_ref[...], preferred_element_type=jnp.float32
    ).astype(o_ref.dtype)


def _lora_kernel_tiled(x_ref, a_ref, b_ref, o_ref, xa_ref, *, scaling):
    # Fallback for very large in_dim: grid = (M/tm, out_dim/tn).
    # xa_ref: (tm, r) scratch in B's dtype, computed once per row tile and
    # reused for every output-column tile.
    # NOTE: only correct because j is the innermost grid axis and only the i
    # axis is marked "parallel" (the xa scratch carries across j).
    j = pl.program_id(1)

    @pl.when(j == 0)
    def _():
        xa = jnp.dot(x_ref[...], a_ref[...], preferred_element_type=jnp.float32)
        xa_ref[...] = (scaling * xa).astype(xa_ref.dtype)

    o_ref[...] = jnp.dot(
        xa_ref[...], b_ref[...], preferred_element_type=jnp.float32
    ).astype(o_ref.dtype)


# ---------------------------------------------------------------------------
# Wrapper
# ---------------------------------------------------------------------------

_MAX_TM = 1024        # HBM-roofline gains are flat beyond ~1024 rows
_MIN_FULL_TM = 256    # prefer the full-width-output path when >= this fits


def _vmem_budget_bytes():
    """~75% of this generation's physical VMEM (48 MiB on v7x, 96 MiB on
    v5e/v6e). Conservative 48 MiB fallback if the query is unavailable."""
    cap = None
    try:
        info = pltpu.get_tpu_info()
        cap = getattr(info, "vmem_capacity_bytes", None)
    except Exception:
        cap = None
    if not cap:
        cap = 64 * 1024 * 1024
    return int(cap) * 3 // 4


def lora_forward(x, lora_A, lora_B, scaling):
    """out = scaling * ((x @ lora_A) @ lora_B); x: [..., in_dim]."""
    in_dim, r = lora_A.shape
    r_b, out_dim = lora_B.shape
    assert r_b == r
    scaling = float(scaling)   # static compile-time constant (matches module)

    orig_shape = x.shape
    x2d = x.reshape(-1, in_dim)
    M = x2d.shape[0]

    xi = x2d.dtype.itemsize
    pi = lora_A.dtype.itemsize
    bi = lora_B.dtype.itemsize
    sub = 16 if x2d.dtype == jnp.bfloat16 else 8

    budget = _vmem_budget_bytes()
    tile_budget = budget - (2 * 1024 * 1024)   # headroom for compiler scratch

    # Pallas double-buffers every BlockSpec'd input, including the
    # grid-invariant A and B, so count them twice (honest estimate).
    fixed_ab = 2 * in_dim * r * pi + 2 * r * out_dim * bi
    avail = tile_budget - fixed_ab
    # Per-row VMEM cost in the full-width path: double-buffered x + out rows
    # plus one intermediate row in B's dtype.
    row_bytes_full = 2 * in_dim * xi + 2 * out_dim * xi + r * bi
    tm_full = avail // row_bytes_full if avail > 0 else 0

    use_full = tm_full >= min(_MIN_FULL_TM, _round_up(M, sub))

    if use_full:
        # ---- Full-width output path: grid = (cdiv(M, tm),) ----
        tm = max(_round_down(min(tm_full, _MAX_TM), sub), sub)
        # Keep >= 2 row tiles when there is enough work so the "parallel" axis
        # can shard across the two v7x TensorCores (harmless on v5e/v6e).
        if M > 2 * _MIN_FULL_TM:
            half = _round_up(-(-M // 2), sub)
            tm = min(tm, max(_MIN_FULL_TM, half))
        if _round_up(M, sub) <= tm:
            tm = M          # single full-dim block: always legal, no ragged edge
        grid = (pl.cdiv(M, tm),)

        kernel = functools.partial(_lora_kernel_full, scaling=scaling)
        out2d = pl.pallas_call(
            kernel,
            out_shape=jax.ShapeDtypeStruct((M, out_dim), x.dtype),
            grid_spec=pltpu.PrefetchScalarGridSpec(
                num_scalar_prefetch=0,
                grid=grid,
                in_specs=[
                    pl.BlockSpec((tm, in_dim), lambda i: (i, 0)),
                    pl.BlockSpec((in_dim, r), lambda i: (0, 0)),    # resident A
                    pl.BlockSpec((r, out_dim), lambda i: (0, 0)),   # resident B
                ],
                out_specs=pl.BlockSpec((tm, out_dim), lambda i: (i, 0)),
            ),
            compiler_params=pltpu.CompilerParams(
                dimension_semantics=("parallel",),
                vmem_limit_bytes=budget,
            ),
        )(x2d, lora_A, lora_B)
    else:
        # ---- Fallback for very large in_dim: tile the output columns ----
        fixed_a = 2 * in_dim * r * pi
        avail2 = tile_budget - fixed_a
        tm = (avail2 * 2 // 3) // (2 * in_dim * xi) if avail2 > 0 else sub
        tm = max(_round_down(min(tm, 512), sub), sub)
        if _round_up(M, sub) <= tm:
            tm = M
        rest = avail2 - 2 * tm * in_dim * xi - tm * r * bi
        tn = rest // (2 * tm * xi + 2 * r * bi) if rest > 0 else 128
        tn = max(_round_down(min(tn, 2048), 128), 128)
        if tn >= out_dim:
            tn = out_dim
        grid = (pl.cdiv(M, tm), pl.cdiv(out_dim, tn))

        kernel = functools.partial(_lora_kernel_tiled, scaling=scaling)
        out2d = pl.pallas_call(
            kernel,
            out_shape=jax.ShapeDtypeStruct((M, out_dim), x.dtype),
            grid_spec=pltpu.PrefetchScalarGridSpec(
                num_scalar_prefetch=0,
                grid=grid,
                in_specs=[
                    # x tile: re-fetched only when i changes (constant along j).
                    pl.BlockSpec((tm, in_dim), lambda i, j: (i, 0)),
                    # A: resident across the whole grid.
                    pl.BlockSpec((in_dim, r), lambda i, j: (0, 0)),
                    # B: column tile j (too large to keep resident here).
                    pl.BlockSpec((r, tn), lambda i, j: (0, j)),
                ],
                out_specs=pl.BlockSpec((tm, tn), lambda i, j: (i, j)),
                scratch_shapes=[pltpu.VMEM((tm, r), lora_B.dtype)],
            ),
            compiler_params=pltpu.CompilerParams(
                # j must stay innermost + "arbitrary": xa is computed at j == 0
                # and reused for j > 0.
                dimension_semantics=("parallel", "arbitrary"),
                vmem_limit_bytes=budget,
            ),
        )(x2d, lora_A, lora_B)

    return out2d.reshape(orig_shape[:-1] + (out_dim,))


def init_lora_params(key, in_dim, bottle_dim, dtype=jnp.float32):
    """Deterministic re-implementation of the PyTorch __init__.

    lora_A: kaiming_uniform_(a=sqrt(5)) on an (in_dim, bottle_dim) tensor
            -> fan_in = bottle_dim, bound = 1/sqrt(fan_in)
    lora_B: zeros
    scaling: 1 / bottle_dim
    """
    bound = 1.0 / math.sqrt(bottle_dim)
    lora_A = jax.random.uniform(
        key, (in_dim, bottle_dim), dtype=dtype, minval=-bound, maxval=bound
    )
    lora_B = jnp.zeros((bottle_dim, in_dim), dtype=dtype)
    scaling = 1.0 / bottle_dim
    return lora_A, lora_B, scaling


if __name__ == "__main__":
    key = jax.random.PRNGKey(0)
    k_param, k_x, k_b, k_x2, k_x3 = jax.random.split(key, 5)

    batch, seq, in_dim, bottle_dim = 2, 8, 32, 8
    lora_A, lora_B, scaling = init_lora_params(k_param, in_dim, bottle_dim)
    x = jax.random.normal(k_x, (batch, seq, in_dim), dtype=jnp.float32)

    # 1) Module-faithful check: freshly initialized lora_B is zero -> output zero.
    out = jax.block_until_ready(lora_forward(x, lora_A, lora_B, scaling))
    ref = scaling * ((x @ lora_A) @ lora_B)
    assert out.shape == x.shape
    assert jnp.allclose(out, ref, atol=1e-5), "mismatch vs zero-B reference"

    # 2) Nonzero-B check with M = 15 (not a multiple of 8): single full-dim
    #    row tile, no padding, validates second matmul + scaling + cast.
    lora_B_nz = 0.1 * jax.random.normal(k_b, (bottle_dim, in_dim), dtype=jnp.float32)
    x2 = jax.random.normal(k_x2, (3, 5, in_dim), dtype=jnp.float32)  # M = 15
    out2 = jax.block_until_ready(lora_forward(x2, lora_A, lora_B_nz, scaling))
    ref2 = scaling * ((x2 @ lora_A) @ lora_B_nz)
    assert out2.shape == x2.shape
    assert jnp.allclose(out2, ref2, atol=1e-4, rtol=1e-4), "mismatch vs nonzero-B reference"

    # 3) Ragged multi-tile check: M = 520 -> 2 row tiles with a partial last
    #    block (no wrapper-side pad/slice), nonzero B.
    x3 = jax.random.normal(k_x3, (2, 260, in_dim), dtype=jnp.float32)  # M = 520
    out3 = jax.block_until_ready(lora_forward(x3, lora_A, lora_B_nz, scaling))
    ref3 = scaling * ((x3 @ lora_A) @ lora_B_nz)
    assert out3.shape == x3.shape
    assert jnp.allclose(out3, ref3, atol=1e-4, rtol=1e-4), "mismatch vs ragged-M reference"

    print("KERNEL_OK")
</pallas_src>

<mosaic_0001>
module attributes {stable_mosaic.version = 11 : i64} {
  func.func @_lora_kernel_full(%arg0: i32, %arg1: memref<16x32xf32, #tpu.memory_space<vmem>>, %arg2: memref<32x8xf32, #tpu.memory_space<vmem>>, %arg3: memref<8x32xf32, #tpu.memory_space<vmem>>, %arg4: memref<16x32xf32, #tpu.memory_space<vmem>>) attributes {dimension_semantics = [#tpu.dimension_semantics<parallel>], iteration_bounds = array<i64: 1>, scalar_prefetch = 0 : i64, scratch_operands = 0 : i64, tpu.core_type = #tpu.core_type<tc>, window_params = [{transform_indices = @transform_0, window_bounds = array<i64: 16, 32>}, {pipeline_mode = #tpu.pipeline_mode<synchronous>, transform_indices = @transform_1, window_bounds = array<i64: 32, 8>}, {pipeline_mode = #tpu.pipeline_mode<synchronous>, transform_indices = @transform_2, window_bounds = array<i64: 8, 32>}, {transform_indices = @transform_3, window_bounds = array<i64: 16, 32>}]} {
    %c0 = arith.constant 0 : index
    %c0_0 = arith.constant 0 : index
    %0 = vector.load %arg1[%c0, %c0_0] : memref<16x32xf32, #tpu.memory_space<vmem>>, vector<16x32xf32>
    %c0_1 = arith.constant 0 : index
    %c0_2 = arith.constant 0 : index
    %1 = vector.load %arg2[%c0_1, %c0_2] : memref<32x8xf32, #tpu.memory_space<vmem>>, vector<32x8xf32>
    %cst = arith.constant dense<0.000000e+00> : vector<16x8xf32>
    %2 = tpu.matmul %0, %1, %cst {dimension_numbers = #tpu.dot_dimension_numbers<[1], [0], [0], [1], [0, 0, 1, 1], [], []>} : vector<16x32xf32>, vector<32x8xf32>, vector<16x8xf32> -> vector<16x8xf32>
    %cst_3 = arith.constant 1.250000e-01 : f32
    %3 = vector.broadcast %cst_3 : f32 to vector<16x8xf32>
    %4 = arith.mulf %3, %2 : vector<16x8xf32>
    %c0_4 = arith.constant 0 : index
    %c0_5 = arith.constant 0 : index
    %5 = vector.load %arg3[%c0_4, %c0_5] : memref<8x32xf32, #tpu.memory_space<vmem>>, vector<8x32xf32>
    %cst_6 = arith.constant dense<0.000000e+00> : vector<16x32xf32>
    %6 = tpu.matmul %4, %5, %cst_6 {dimension_numbers = #tpu.dot_dimension_numbers<[1], [0], [0], [1], [0, 0, 1, 1], [], []>} : vector<16x8xf32>, vector<8x32xf32>, vector<16x32xf32> -> vector<16x32xf32>
    %c0_7 = arith.constant 0 : index
    %c0_8 = arith.constant 0 : index
    %7 = vector.load %arg4[%c0_7, %c0_8] : memref<16x32xf32, #tpu.memory_space<vmem>>, vector<16x32xf32>
    tpu.vector_store %arg4[%c0_7, %c0_8], %6 {strides = array<i32>} : memref<16x32xf32, #tpu.memory_space<vmem>>, vector<16x32xf32>,
    return
  }
  func.func @transform_0(%arg0: i32) -> (i32, i32) {
    %c0_i32 = arith.constant 0 : i32
    %c0_i32_0 = arith.constant 0 : i32
    return %arg0, %c0_i32 : i32, i32
  }
  func.func @transform_1(%arg0: i32) -> (i32, i32) {
    %c0_i32 = arith.constant 0 : i32
    %c0_i32_0 = arith.constant 0 : i32
    %c0_i32_1 = arith.constant 0 : i32
    return %c0_i32, %c0_i32_0 : i32, i32
  }
  func.func @transform_2(%arg0: i32) -> (i32, i32) {
    %c0_i32 = arith.constant 0 : i32
    %c0_i32_0 = arith.constant 0 : i32
    %c0_i32_1 = arith.constant 0 : i32
    return %c0_i32, %c0_i32_0 : i32, i32
  }
  func.func @transform_3(%arg0: i32) -> (i32, i32) {
    %c0_i32 = arith.constant 0 : i32
    %c0_i32_0 = arith.constant 0 : i32
    return %arg0, %c0_i32 : i32, i32
  }
}

</mosaic_0001>

<llo_original>
// kernel: tpu_custom_call.1
$region0: #{tpu_custom_call.1}
  #allocation0 [shape = 'u32[]', space=smem, size = 0x4, offset = 0x4, fixed_abs, tag = 'smem constant byte address 0x4 - core index']
  #allocation1 [shape = 'u32[144,128]{1,0:T(1,128)}', space=vmem, size = 0x12000, scoped, tag = 'internal scratch']
  %s0 = inlined_call_operand.vmem [shape: f32[16,32], index: 0, kind: input, shape index: {}]
  %s1 = inlined_call_operand.vmem [shape: f32[32,8], index: 1, kind: input, shape index: {}]
  %s2 = inlined_call_operand.vmem [shape: f32[8,32], index: 2, kind: input, shape index: {}]
  %s3 = inlined_call_operand.hbm [shape: f32[16,32], index: 3, kind: output, shape index: {}]
  %s4 = sld [smem:[#allocation0]]
  $region22: #{tpu_custom_call.1} parent=0
    _
  %s6 = ssub.s32 1, %s4
  %s7 = scalar_select 0, %s6, %s4
  $region1: #{tpu_custom_call.1} parent=0
    #allocation2 [shape = 'u8[8192]{0}', space=vmem, size = 0x2000, scoped, tag = 'output window, operand 0, single buffered']
    #allocation3 [shape = 's32[1]{0}', space=sflag, size = 0x4, scoped, tag = 'scoped memory for tpu_custom_call.1']
    %8 = vsyncpa [#allocation3], 0
    // Predicated region
    $region2: #{tpu_custom_call.1} parent=1 // pred_check
      _
    $region3: #{tpu_custom_call.1} parent=1 // pred_check_branch
      %10 = sbr.rel (0) target = $region5
    $region4: #{tpu_custom_call.1} parent=1 // pred_region
      _
    $region5: #{tpu_custom_call.1} parent=1 // pred_fallthru
      _
    // Predicated region
    $region6: #{tpu_custom_call.1} parent=1 // pred_check
      _
    $region7: #{tpu_custom_call.1} parent=1 // pred_check_branch
      %12 = sbr.rel (0) target = $region9
    $region8: #{tpu_custom_call.1} parent=1 // pred_region
      _
    $region9: #{tpu_custom_call.1} parent=1 // pred_fallthru
      _
    // Predicated region
    $region10: #{tpu_custom_call.1} parent=1 // pred_check
      _
    $region11: #{tpu_custom_call.1} parent=1 // pred_check_branch
      %14 = sbr.rel (0) target = $region13
    $region12: #{tpu_custom_call.1} parent=1 // pred_region
      _
    $region13: #{tpu_custom_call.1} parent=1 // pred_fallthru
      _
    %v15 = vld [vmem:[%s0] sm:$0xff]
    %v16 = vld [vmem:[%s0 + $0x8] sm:$0xff]
    %v17 = vld [vmem:[%s1] sm:$0xff]
    %v18 = vld [vmem:[%s1 + $0x8] sm:$0xff]
    %v19 = vld [vmem:[%s1 + $0x10] sm:$0xff]
    %v20 = vld [vmem:[%s1 + $0x18] sm:$0xff]
    %vm21 = vcmask 261120
    %v23 = vsel %vm21, %v15, 0
    %v26 = vsel %vm21, %v16, 0
    %28 = vmatprep.subr.mxu0 0.0
    %29 = vmatpush1.msra.mxu0 0.0
    %30 = vmatprep.subr.mxu0 0.0
    %31 = vmatpush1.msra.mxu0 0.0
    %32 = vmatprep.subr.mxu0 0.0
    %33 = vmatpush1.msra.mxu0 0.0
    %34 = vmatprep.subr.mxu0 0.0
    %35 = vmatpush1.msra.mxu0 0.0
    %36 = vmatprep.subr.mxu0 0.0
    %37 = vmatpush1.msra.mxu0 0.0
    %38 = vmatprep.subr.mxu0 0.0
    %39 = vmatpush1.msra.mxu0 0.0
    %40 = vmatprep.subr.mxu0 0.0
    %41 = vmatpush1.msra.mxu0 0.0
    %42 = vmatprep.subr.mxu0 0.0
    %43 = vmatpush1.msra.mxu0 0.0
    %44 = vmatprep.subr.mxu0 0.0
    %45 = vmatpush1.msra.mxu0 0.0
    %46 = vmatprep.subr.mxu0 0.0
    %47 = vmatpush1.msra.mxu0 0.0
    %48 = vmatprep.subr.mxu0 0.0
    %49 = vmatpush1.msra.mxu0 0.0
    %50 = vmatprep.subr.mxu0 0.0
    %51 = vmatpush1.msra.mxu0 0.0
    %52 = vmatprep.subr.mxu0 0.0
    %53 = vmatpush1.msra.mxu0 %v20
    %54 = vmatprep.subr.mxu0 0.0
    %55 = vmatpush1.msra.mxu0 %v19
    %56 = vmatprep.subr.mxu0 0.0
    %57 = vmatpush1.msra.mxu0 %v18
    %58 = vmatprep.subr.mxu0 0.0
    %59 = vmatpush1.msra.mxu0 %v17
    %60 = vmatprep.subr.mxu0 0.0
    %61 = vmatpush2.msra.mxu0 0.0
    %62 = vmatprep.subr.mxu0 0.0
    %63 = vmatpush2.msra.mxu0 0.0
    %64 = vmatprep.subr.mxu0 0.0
    %65 = vmatpush2.msra.mxu0 0.0
    %66 = vmatprep.subr.mxu0 0.0
    %67 = vmatpush2.msra.mxu0 0.0
    %68 = vmatprep.subr.mxu0 0.0
    %69 = vmatpush2.msra.mxu0 0.0
    %70 = vmatprep.subr.mxu0 0.0
    %71 = vmatpush2.msra.mxu0 0.0
    %72 = vmatprep.subr.mxu0 0.0
    %73 = vmatpush2.msra.mxu0 0.0
    %74 = vmatprep.subr.mxu0 0.0
    %75 = vmatpush2.msra.mxu0 0.0
    %76 = vmatprep.subr.mxu0 0.0
    %77 = vmatpush2.msra.mxu0 0.0
    %78 = vmatprep.subr.mxu0 0.0
    %79 = vmatpush2.msra.mxu0 0.0
    %80 = vmatprep.subr.mxu0 0.0
    %81 = vmatpush2.msra.mxu0 0.0
    %82 = vmatprep.subr.mxu0 0.0
    %83 = vmatpush2.msra.mxu0 0.0
    %84 = vmatprep.subr.mxu0 0.0
    %85 = vmatpush2.msra.mxu0 0.0
    %86 = vmatprep.subr.mxu0 0.0
    %87 = vmatpush2.msra.mxu0 0.0
    %88 = vmatprep.subr.mxu0 0.0
    %89 = vmatpush2.msra.mxu0 0.0
    %90 = vmatprep.subr.mxu0 0.0
    %91 = vmatpush2.msra.mxu0 0.0
    %92 = vmatprep.mubr.f32.mxu0 0.0
    %93 = vmatmul.mubr.f32.gmra.mxu0 %v23
    %v94 = vpop.f32.mrf.mxu0
    %v95 = vadd.f32 0.0, %v94
    %v96 = vpop.f32.mrf.mxu0
    %97 = vmatprep.mubr.f32.mxu0 0.0
    %98 = vmatmul.mubr.f32.gmra.mxu0 %v26
    %v99 = vpop.f32.mrf.mxu0
    %v100 = vadd.f32 0.0, %v99
    %v101 = vpop.f32.mrf.mxu0
    %102 = vdwg.mxu0
    %v103 = vmul.f32 %v95, 0.125
    %v104 = vmul.f32 %v100, 0.125
    %v105 = vld [vmem:[%s2] sm:$0xff]
    %vm106 = vcmask 64512
    %v108 = vsel %vm106, %v103, 0
    %v111 = vsel %vm106, %v104, 0
    %113 = vmatprep.subr.mxu0 0.0
    %114 = vmatpush1.msra.mxu0 0.0
    %115 = vmatprep.subr.mxu0 0.0
    %116 = vmatpush1.msra.mxu0 0.0
    %117 = vmatprep.subr.mxu0 0.0
    %118 = vmatpush1.msra.mxu0 0.0
    %119 = vmatprep.subr.mxu0 0.0
    %120 = vmatpush1.msra.mxu0 0.0
    %121 = vmatprep.subr.mxu0 0.0
    %122 = vmatpush1.msra.mxu0 0.0
    %123 = vmatprep.subr.mxu0 0.0
    %124 = vmatpush1.msra.mxu0 0.0
    %125 = vmatprep.subr.mxu0 0.0
    %126 = vmatpush1.msra.mxu0 0.0
    %127 = vmatprep.subr.mxu0 0.0
    %128 = vmatpush1.msra.mxu0 0.0
    %129 = vmatprep.subr.mxu0 0.0
    %130 = vmatpush1.msra.mxu0 0.0
    %131 = vmatprep.subr.mxu0 0.0
    %132 = vmatpush1.msra.mxu0 0.0
    %133 = vmatprep.subr.mxu0 0.0
    %134 = vmatpush1.msra.mxu0 0.0
    %135 = vmatprep.subr.mxu0 0.0
    %136 = vmatpush1.msra.mxu0 0.0
    %137 = vmatprep.subr.mxu0 0.0
    %138 = vmatpush1.msra.mxu0 0.0
    %139 = vmatprep.subr.mxu0 0.0
    %140 = vmatpush1.msra.mxu0 0.0
    %141 = vmatprep.subr.mxu0 0.0
    %142 = vmatpush1.msra.mxu0 0.0
    %143 = vmatprep.subr.mxu0 0.0
    %144 = vmatpush1.msra.mxu0 %v105
    %145 = vmatprep.subr.mxu0 0.0
    %146 = vmatpush2.msra.mxu0 0.0
    %147 = vmatprep.subr.mxu0 0.0
    %148 = vmatpush2.msra.mxu0 0.0
    %149 = vmatprep.subr.mxu0 0.0
    %150 = vmatpush2.msra.mxu0 0.0
    %151 = vmatprep.subr.mxu0 0.0
    %152 = vmatpush2.msra.mxu0 0.0
    %153 = vmatprep.subr.mxu0 0.0
    %154 = vmatpush2.msra.mxu0 0.0
    %155 = vmatprep.subr.mxu0 0.0
    %156 = vmatpush2.msra.mxu0 0.0
    %157 = vmatprep.subr.mxu0 0.0
    %158 = vmatpush2.msra.mxu0 0.0
    %159 = vmatprep.subr.mxu0 0.0
    %160 = vmatpush2.msra.mxu0 0.0
    %161 = vmatprep.subr.mxu0 0.0
    %162 = vmatpush2.msra.mxu0 0.0
    %163 = vmatprep.subr.mxu0 0.0
    %164 = vmatpush2.msra.mxu0 0.0
    %165 = vmatprep.subr.mxu0 0.0
    %166 = vmatpush2.msra.mxu0 0.0
    %167 = vmatprep.subr.mxu0 0.0
    %168 = vmatpush2.msra.mxu0 0.0
    %169 = vmatprep.subr.mxu0 0.0
    %170 = vmatpush2.msra.mxu0 0.0
    %171 = vmatprep.subr.mxu0 0.0
    %172 = vmatpush2.msra.mxu0 0.0
    %173 = vmatprep.subr.mxu0 0.0
    %174 = vmatpush2.msra.mxu0 0.0
    %175 = vmatprep.subr.mxu0 0.0
    %176 = vmatpush2.msra.mxu0 0.0
    %177 = vmatprep.mubr.f32.mxu0 0.0
    %178 = vmatmul.mubr.f32.gmra.mxu0 %v108
    %v179 = vpop.f32.mrf.mxu0
    %v180 = vadd.f32 0.0, %v179
    %v181 = vpop.f32.mrf.mxu0
    %182 = vmatprep.mubr.f32.mxu0 0.0
    %183 = vmatmul.mubr.f32.gmra.mxu0 %v111
    %v184 = vpop.f32.mrf.mxu0
    %v185 = vadd.f32 0.0, %v184
    %v186 = vpop.f32.mrf.mxu0
    %187 = vdwg.mxu0
    %188 = vst.msk [vmem:[#allocation2] sm:$0xff] %vm21, %v180
    %189 = vst.msk [vmem:[#allocation2 + $0x8] sm:$0xff] %vm21, %v185
    // Predicated region
    $region14: #{tpu_custom_call.1} parent=1 // pred_check
      _
    $region15: #{tpu_custom_call.1} parent=1 // pred_check_branch
      %191 = sbr.rel (0) target = $region17
    $region16: #{tpu_custom_call.1} parent=1 // pred_region
      %s193 = ssub.s32 256, 256
      %194 = vsyncadd [#allocation3], %s193
      %s195 = sshll.u32 [#allocation2], 4
      %s196 = int_to_ptr.vmem [resolvable:$true] %s195
      %201 = dma.vmem_to_hbm [thread:$0]  %s196, 256, %s3, [#allocation3], 128, 128, 8
    $region17: #{tpu_custom_call.1} parent=1 // pred_fallthru
      _
    // Predicated region
    $region18: #{tpu_custom_call.1} parent=1 // pred_check
      _
    $region19: #{tpu_custom_call.1} parent=1 // pred_check_branch
      %203 = sbr.rel (0) target = $region21
    $region20: #{tpu_custom_call.1} parent=1 // pred_region
      %204 = dma.done [#allocation3], 256
    $region21: #{tpu_custom_call.1} parent=1 // pred_fallthru
      _
    %205 = vsyncpa [#allocation3], 1

</llo_original>
